<compile_context>
chip_gen: v5e
topology: v5e:2x2
jax: 0.10.0
libtpu: 0.0.40
codegen_flags: <defaults>
</compile_context>

<pallas_src>
import functools

import jax
import jax.numpy as jnp
from jax import lax
from jax.experimental import pallas as pl
from jax.experimental.pallas import tpu as pltpu

_LANE = 128
# Contract dim 1 of both operands: (M, K) x (N, K) -> (M, N); batch -> lanes.
_TRANS_RHS_DIMS = (((1,), (1,)), ((), ()))


def _round_up(x, m):
    return ((x + m - 1) // m) * m


def _mlp_encoder_kernel(num_layers, vec_slices, output_logits, eps, *refs):
    # refs = [obs, W0, ..., W_{L-1}, Wfc, packed_vec, out]
    obs_ref = refs[0]
    w_refs = refs[1:1 + num_layers + 1]          # trunk weights (out,in) + Wfc
    vec_ref = refs[1 + num_layers + 1]           # packed biases/LN params, (K, 1) f32
    out_ref = refs[-1]

    def vec(name):                               # static slice -> (n, 1) f32 column
        start, size = vec_slices[name]
        return vec_ref[start:start + size, :]

    x = obs_ref[...].astype(jnp.float32)         # (TB, obs_dim) f32

    # Layer 0: (hidden, TB) = W0 (hidden, obs_dim) . obs^T — contract obs on its
    # last dim so the batch lands in the MXU lane/N dimension (no explicit .T).
    h = lax.dot_general(w_refs[0][...], x, _TRANS_RHS_DIMS,
                        preferred_element_type=jnp.float32)
    h = jnp.maximum(h + vec("b0"), 0.0)

    # Remaining trunk layers: standard (out, in) @ (in, TB) matmuls, lane-dense.
    for i in range(1, num_layers):
        h = jnp.dot(w_refs[i][...], h, preferred_element_type=jnp.float32)
        h = jnp.maximum(h + vec(f"b{i}"), 0.0)

    # Final projection to (feature_dim, TB).
    h_fc = jnp.dot(w_refs[num_layers][...], h,
                   preferred_element_type=jnp.float32) + vec("bfc")

    # LayerNorm over the feature axis (axis 0 == sublanes): biased variance, eps.
    mean = jnp.mean(h_fc, axis=0, keepdims=True)
    centered = h_fc - mean
    var = jnp.mean(centered * centered, axis=0, keepdims=True)
    h_norm = centered * lax.rsqrt(var + eps) * vec("gamma") + vec("beta")

    out = h_norm if output_logits else jnp.tanh(h_norm)
    out_ref[...] = out.astype(out_ref.dtype)


def mlp_encoder_forward(obs, params, *, num_layers, output_logits=False, eps=1e-5,
                        out_dtype=jnp.bfloat16, block_b=2048):
    """params: 'W{i}' (in,out), 'b{i}' for i in range(num_layers); 'Wfc', 'bfc',
       'gamma', 'beta'.  obs: (B, obs_dim).  Returns (B, feature_dim) out_dtype."""
    B, obs_dim = obs.shape
    hidden = params["W0"].shape[1]
    feature_dim = params["Wfc"].shape[1]

    # ---- batch tiling: batch is the LANE dim of the output ------------------
    tb_cap = max(_LANE, (max(block_b, _LANE) // _LANE) * _LANE)
    if B < _LANE:
        tb = B                                    # single block == full batch dim
    else:
        b_lane = _round_up(B, _LANE)
        if b_lane >= 2 * _LANE:                   # >=2 grid steps -> both v7x TCs work
            tb_cap = min(tb_cap, _round_up(b_lane // 2, _LANE))
        tb = min(tb_cap, b_lane)
    grid = (pl.cdiv(B, tb),)                      # ragged edge handled by Pallas

    # ---- operands ------------------------------------------------------------
    # obs read directly (f32, no wrapper cast/pad pass). Weights resident,
    # PyTorch (out, in) orientation (tiny one-time transpose at trace level).
    inputs = [obs]
    in_specs = [pl.BlockSpec((tb, obs_dim), lambda i: (i, 0))]

    def resident(x):
        inputs.append(x)
        in_specs.append(pl.BlockSpec(x.shape, lambda i: (0, 0)))

    for i in range(num_layers):
        resident(params[f"W{i}"].T.astype(jnp.float32))        # (hidden, in)
    resident(params["Wfc"].T.astype(jnp.float32))              # (feature_dim, hidden)

    # Consolidate all 1-D params into one resident (K, 1) f32 column
    # (8-aligned segments, static slices in-kernel).
    segs = [(f"b{i}", params[f"b{i}"]) for i in range(num_layers)]
    segs += [("bfc", params["bfc"]), ("gamma", params["gamma"]), ("beta", params["beta"])]
    vec_slices, chunks, off = {}, [], 0
    for name, v in segs:
        v = v.reshape(-1).astype(jnp.float32)
        n = int(v.shape[0])
        n_pad = _round_up(n, 8)
        chunks.append(jnp.pad(v, (0, n_pad - n)) if n_pad != n else v)
        vec_slices[name] = (off, n)
        off += n_pad
    resident(jnp.concatenate(chunks).reshape(-1, 1))

    kernel = functools.partial(_mlp_encoder_kernel, num_layers, vec_slices,
                               output_logits, eps)

    # Advisory cost estimate for the XLA scheduler.
    flops = 2 * B * (obs_dim * hidden + (num_layers - 1) * hidden * hidden
                     + hidden * feature_dim)
    transc = B * ((feature_dim if not output_logits else 0) + 1)   # tanh + rsqrt
    param_bytes = sum(int(x.size) * x.dtype.itemsize for x in inputs[1:])
    bytes_accessed = (int(obs.size) * obs.dtype.itemsize
                      + B * feature_dim * jnp.dtype(out_dtype).itemsize
                      + param_bytes)

    out_t = pl.pallas_call(
        kernel,
        grid=grid,
        in_specs=in_specs,
        out_specs=pl.BlockSpec((feature_dim, tb), lambda i: (0, i)),
        out_shape=jax.ShapeDtypeStruct((feature_dim, B), out_dtype),
        compiler_params=pltpu.CompilerParams(
            dimension_semantics=("parallel",),
        ),
        cost_estimate=pl.CostEstimate(
            flops=int(flops),
            transcendentals=int(transc),
            bytes_accessed=int(bytes_accessed),
        ),
    )(*inputs)

    # Tiny (feature_dim, B) -> (B, feature_dim) transpose back in the wrapper.
    return out_t.T


def _reference_forward(obs, params, *, num_layers, output_logits=False, eps=1e-5):
    """Pure-JAX f32 reference mirroring the PyTorch module."""
    h = obs.astype(jnp.float32)
    for i in range(num_layers):
        h = jnp.maximum(jnp.dot(h, params[f"W{i}"]) + params[f"b{i}"], 0.0)
    h_fc = jnp.dot(h, params["Wfc"]) + params["bfc"]
    mean = jnp.mean(h_fc, axis=-1, keepdims=True)
    var = jnp.mean((h_fc - mean) ** 2, axis=-1, keepdims=True)
    h_norm = (h_fc - mean) * jax.lax.rsqrt(var + eps) * params["gamma"] + params["beta"]
    return h_norm if output_logits else jnp.tanh(h_norm)


def _init_params(key, obs_dim, hidden, feature_dim, num_layers):
    params = {}
    dims_in = [obs_dim] + [hidden] * (num_layers - 1)
    for i in range(num_layers):
        key, k1, k2 = jax.random.split(key, 3)
        # PyTorch nn.Linear weight is (out, in); stored here as (in, out).
        params[f"W{i}"] = 0.1 * jax.random.normal(k1, (dims_in[i], hidden), jnp.float32)
        params[f"b{i}"] = 0.1 * jax.random.normal(k2, (hidden,), jnp.float32)
    key, k1, k2 = jax.random.split(key, 3)
    params["Wfc"] = 0.1 * jax.random.normal(k1, (hidden, feature_dim), jnp.float32)
    params["bfc"] = 0.1 * jax.random.normal(k2, (feature_dim,), jnp.float32)
    params["gamma"] = jnp.ones((feature_dim,), jnp.float32)
    params["beta"] = jnp.zeros((feature_dim,), jnp.float32)
    return params


if __name__ == "__main__":
    # Small config consistent with the module: obs_shape=(obs_dim,), MLP trunk,
    # fc projection, LayerNorm, tanh.
    batch = 8
    obs_dim = 24
    encoder_hidden_size = 32
    feature_dim = 16
    num_layers = 2

    key = jax.random.PRNGKey(0)
    key, k_obs, k_big = jax.random.split(key, 3)
    obs = jax.random.normal(k_obs, (batch, obs_dim), jnp.float32)
    params = _init_params(key, obs_dim, encoder_hidden_size, feature_dim, num_layers)

    ref = _reference_forward(obs, params, num_layers=num_layers)

    # 1) f32 output path: tight check against the pure-JAX reference.
    out_f32 = jax.block_until_ready(
        mlp_encoder_forward(obs, params, num_layers=num_layers, out_dtype=jnp.float32))
    assert out_f32.shape == (batch, feature_dim)
    assert jnp.allclose(out_f32, ref, atol=2e-5, rtol=2e-5), "f32-output mismatch"

    # 2) Default bf16 output writeback (HBM traffic win); looser tolerance.
    out_bf16 = jax.block_until_ready(
        mlp_encoder_forward(obs, params, num_layers=num_layers))
    assert out_bf16.dtype == jnp.bfloat16
    assert jnp.allclose(out_bf16.astype(jnp.float32), ref, atol=1e-2, rtol=1e-2), \
        "bf16-output mismatch"

    # 3) output_logits=True (no tanh), f32 output.
    out_logits = jax.block_until_ready(
        mlp_encoder_forward(obs, params, num_layers=num_layers, output_logits=True,
                            out_dtype=jnp.float32))
    ref_logits = _reference_forward(obs, params, num_layers=num_layers,
                                    output_logits=True)
    assert jnp.allclose(out_logits, ref_logits, atol=2e-5, rtol=2e-5), "logits mismatch"

    # 4) Larger, non-multiple-of-128 batch: multi-step grid (both v7x cores),
    #    resident weights, ragged edge block handled without padding.
    big_obs = jax.random.normal(k_big, (1003, obs_dim), jnp.float32)
    out_big = jax.block_until_ready(
        mlp_encoder_forward(big_obs, params, num_layers=num_layers, block_b=256,
                            out_dtype=jnp.float32))
    ref_big = _reference_forward(big_obs, params, num_layers=num_layers)
    assert out_big.shape == (1003, feature_dim)
    assert jnp.allclose(out_big, ref_big, atol=2e-5, rtol=2e-5), "big-batch mismatch"

    print("KERNEL_OK")
</pallas_src>

<mosaic_0001>
module attributes {stable_mosaic.version = 11 : i64} {
  func.func @_mlp_encoder_kernel(%arg0: i32, %arg1: memref<8x24xf32, #tpu.memory_space<vmem>>, %arg2: memref<32x24xf32, #tpu.memory_space<vmem>>, %arg3: memref<32x32xf32, #tpu.memory_space<vmem>>, %arg4: memref<16x32xf32, #tpu.memory_space<vmem>>, %arg5: memref<112x1xf32, #tpu.memory_space<vmem>>, %arg6: memref<16x8xf32, #tpu.memory_space<vmem>>) attributes {dimension_semantics = [#tpu.dimension_semantics<parallel>], iteration_bounds = array<i64: 1>, scalar_prefetch = 0 : i64, scratch_operands = 0 : i64, tpu.core_type = #tpu.core_type<tc>, window_params = [{transform_indices = @transform_0, window_bounds = array<i64: 8, 24>}, {pipeline_mode = #tpu.pipeline_mode<synchronous>, transform_indices = @transform_1, window_bounds = array<i64: 32, 24>}, {pipeline_mode = #tpu.pipeline_mode<synchronous>, transform_indices = @transform_2, window_bounds = array<i64: 32, 32>}, {pipeline_mode = #tpu.pipeline_mode<synchronous>, transform_indices = @transform_3, window_bounds = array<i64: 16, 32>}, {pipeline_mode = #tpu.pipeline_mode<synchronous>, transform_indices = @transform_4, window_bounds = array<i64: 112, 1>}, {transform_indices = @transform_5, window_bounds = array<i64: 16, 8>}]} {
    %c0 = arith.constant 0 : index
    %c0_0 = arith.constant 0 : index
    %0 = vector.load %arg1[%c0, %c0_0] : memref<8x24xf32, #tpu.memory_space<vmem>>, vector<8x24xf32>
    %c0_1 = arith.constant 0 : index
    %c0_2 = arith.constant 0 : index
    %1 = vector.load %arg2[%c0_1, %c0_2] : memref<32x24xf32, #tpu.memory_space<vmem>>, vector<32x24xf32>
    %cst = arith.constant dense<0.000000e+00> : vector<32x8xf32>
    %2 = tpu.matmul %1, %0, %cst {dimension_numbers = #tpu.dot_dimension_numbers<[1], [1], [0], [0], [0, 0, 1, 0], [], []>} : vector<32x24xf32>, vector<8x24xf32>, vector<32x8xf32> -> vector<32x8xf32>
    %c0_3 = arith.constant 0 : index
    %c0_4 = arith.constant 0 : index
    %3 = vector.load %arg5[%c0_3, %c0_4] : memref<112x1xf32, #tpu.memory_space<vmem>>, vector<32x1xf32>
    %4 = vector.broadcast %3 : vector<32x1xf32> to vector<32x8xf32>
    %5 = arith.addf %2, %4 : vector<32x8xf32>
    %cst_5 = arith.constant 0.000000e+00 : f32
    %6 = vector.broadcast %cst_5 : f32 to vector<32x8xf32>
    %7 = arith.maximumf %5, %6 : vector<32x8xf32>
    %c0_6 = arith.constant 0 : index
    %c0_7 = arith.constant 0 : index
    %8 = vector.load %arg3[%c0_6, %c0_7] : memref<32x32xf32, #tpu.memory_space<vmem>>, vector<32x32xf32>
    %cst_8 = arith.constant dense<0.000000e+00> : vector<32x8xf32>
    %9 = tpu.matmul %8, %7, %cst_8 {dimension_numbers = #tpu.dot_dimension_numbers<[1], [0], [0], [1], [0, 0, 1, 1], [], []>} : vector<32x32xf32>, vector<32x8xf32>, vector<32x8xf32> -> vector<32x8xf32>
    %c32 = arith.constant 32 : index
    %c0_9 = arith.constant 0 : index
    %10 = vector.load %arg5[%c32, %c0_9] : memref<112x1xf32, #tpu.memory_space<vmem>>, vector<32x1xf32>
    %11 = vector.broadcast %10 : vector<32x1xf32> to vector<32x8xf32>
    %12 = arith.addf %9, %11 : vector<32x8xf32>
    %cst_10 = arith.constant 0.000000e+00 : f32
    %13 = vector.broadcast %cst_10 : f32 to vector<32x8xf32>
    %14 = arith.maximumf %12, %13 : vector<32x8xf32>
    %c0_11 = arith.constant 0 : index
    %c0_12 = arith.constant 0 : index
    %15 = vector.load %arg4[%c0_11, %c0_12] : memref<16x32xf32, #tpu.memory_space<vmem>>, vector<16x32xf32>
    %cst_13 = arith.constant dense<0.000000e+00> : vector<16x8xf32>
    %16 = tpu.matmul %15, %14, %cst_13 {dimension_numbers = #tpu.dot_dimension_numbers<[1], [0], [0], [1], [0, 0, 1, 1], [], []>} : vector<16x32xf32>, vector<32x8xf32>, vector<16x8xf32> -> vector<16x8xf32>
    %c64 = arith.constant 64 : index
    %c0_14 = arith.constant 0 : index
    %17 = vector.load %arg5[%c64, %c0_14] : memref<112x1xf32, #tpu.memory_space<vmem>>, vector<16x1xf32>
    %18 = vector.broadcast %17 : vector<16x1xf32> to vector<16x8xf32>
    %19 = arith.addf %16, %18 : vector<16x8xf32>
    %cst_15 = arith.constant dense<0.000000e+00> : vector<8xf32>
    %20 = vector.multi_reduction <add>, %19, %cst_15 [0] : vector<16x8xf32> to vector<8xf32>
    %21 = vector.shape_cast %20 : vector<8xf32> to vector<1x8xf32>
    %cst_16 = arith.constant 1.600000e+01 : f32
    %22 = vector.broadcast %cst_16 : f32 to vector<1x8xf32>
    %23 = arith.divf %21, %22 : vector<1x8xf32>
    %24 = vector.broadcast %23 : vector<1x8xf32> to vector<16x8xf32>
    %25 = arith.subf %19, %24 : vector<16x8xf32>
    %26 = arith.mulf %25, %25 : vector<16x8xf32>
    %cst_17 = arith.constant dense<0.000000e+00> : vector<8xf32>
    %27 = vector.multi_reduction <add>, %26, %cst_17 [0] : vector<16x8xf32> to vector<8xf32>
    %28 = vector.shape_cast %27 : vector<8xf32> to vector<1x8xf32>
    %cst_18 = arith.constant 1.600000e+01 : f32
    %29 = vector.broadcast %cst_18 : f32 to vector<1x8xf32>
    %30 = arith.divf %28, %29 : vector<1x8xf32>
    %cst_19 = arith.constant 9.99999974E-6 : f32
    %31 = vector.broadcast %cst_19 : f32 to vector<1x8xf32>
    %32 = arith.addf %30, %31 : vector<1x8xf32>
    %33 = math.rsqrt %32 : vector<1x8xf32>
    %34 = vector.broadcast %33 : vector<1x8xf32> to vector<16x8xf32>
    %35 = arith.mulf %25, %34 : vector<16x8xf32>
    %c80 = arith.constant 80 : index
    %c0_20 = arith.constant 0 : index
    %36 = vector.load %arg5[%c80, %c0_20] : memref<112x1xf32, #tpu.memory_space<vmem>>, vector<16x1xf32>
    %37 = vector.broadcast %36 : vector<16x1xf32> to vector<16x8xf32>
    %38 = arith.mulf %35, %37 : vector<16x8xf32>
    %c96 = arith.constant 96 : index
    %c0_21 = arith.constant 0 : index
    %39 = vector.load %arg5[%c96, %c0_21] : memref<112x1xf32, #tpu.memory_space<vmem>>, vector<16x1xf32>
    %40 = vector.broadcast %39 : vector<16x1xf32> to vector<16x8xf32>
    %41 = arith.addf %38, %40 : vector<16x8xf32>
    %42 = math.tanh %41 : vector<16x8xf32>
    %c0_22 = arith.constant 0 : index
    %c0_23 = arith.constant 0 : index
    %43 = vector.load %arg6[%c0_22, %c0_23] : memref<16x8xf32, #tpu.memory_space<vmem>>, vector<16x8xf32>
    tpu.vector_store %arg6[%c0_22, %c0_23], %42 {strides = array<i32>} : memref<16x8xf32, #tpu.memory_space<vmem>>, vector<16x8xf32>,
    return
  }
  func.func @transform_0(%arg0: i32) -> (i32, i32) {
    %c0_i32 = arith.constant 0 : i32
    %c0_i32_0 = arith.constant 0 : i32
    return %arg0, %c0_i32 : i32, i32
  }
  func.func @transform_1(%arg0: i32) -> (i32, i32) {
    %c0_i32 = arith.constant 0 : i32
    %c0_i32_0 = arith.constant 0 : i32
    %c0_i32_1 = arith.constant 0 : i32
    return %c0_i32, %c0_i32_0 : i32, i32
  }
  func.func @transform_2(%arg0: i32) -> (i32, i32) {
    %c0_i32 = arith.constant 0 : i32
    %c0_i32_0 = arith.constant 0 : i32
    %c0_i32_1 = arith.constant 0 : i32
    return %c0_i32, %c0_i32_0 : i32, i32
  }
  func.func @transform_3(%arg0: i32) -> (i32, i32) {
    %c0_i32 = arith.constant 0 : i32
    %c0_i32_0 = arith.constant 0 : i32
    %c0_i32_1 = arith.constant 0 : i32
    return %c0_i32, %c0_i32_0 : i32, i32
  }
  func.func @transform_4(%arg0: i32) -> (i32, i32) {
    %c0_i32 = arith.constant 0 : i32
    %c0_i32_0 = arith.constant 0 : i32
    %c0_i32_1 = arith.constant 0 : i32
    return %c0_i32, %c0_i32_0 : i32, i32
  }
  func.func @transform_5(%arg0: i32) -> (i32, i32) {
    %c0_i32 = arith.constant 0 : i32
    %c0_i32_0 = arith.constant 0 : i32
    return %c0_i32, %arg0 : i32, i32
  }
}

</mosaic_0001>

<llo_original>
// kernel: tpu_custom_call.1
$region0: #{tpu_custom_call.1}
  #allocation0 [shape = 'u32[]', space=smem, size = 0x4, offset = 0x4, fixed_abs, tag = 'smem constant byte address 0x4 - core index']
  #allocation1 [shape = 'u32[72,128]{1,0:T(1,128)}', space=vmem, size = 0x9000, scoped, tag = 'internal scratch']
  %s0 = inlined_call_operand.vmem [shape: f32[8,24], index: 0, kind: input, shape index: {}]
  %s1 = inlined_call_operand.vmem [shape: f32[32,24], index: 1, kind: input, shape index: {}]
  %s2 = inlined_call_operand.vmem [shape: f32[32,32], index: 2, kind: input, shape index: {}]
  %s3 = inlined_call_operand.vmem [shape: f32[16,32], index: 3, kind: input, shape index: {}]
  %s4 = inlined_call_operand.vmem [shape: f32[112,1], index: 4, kind: input, shape index: {}]
  %s5 = inlined_call_operand.vmem [shape: f32[16,8], index: 5, kind: output, shape index: {}]
  %s6 = sld [smem:[#allocation0]]
  $region30: #{tpu_custom_call.1} parent=0
    _
  %s8 = ssub.s32 1, %s6
  %s9 = scalar_select 0, %s8, %s6
  // Predicated region
  $region2: #{tpu_custom_call.1} parent=0 // pred_check
    _
  $region3: #{tpu_custom_call.1} parent=0 // pred_check_branch
    %11 = sbr.rel (0) target = $region5
  $region4: #{tpu_custom_call.1} parent=0 // pred_region
    _
  $region5: #{tpu_custom_call.1} parent=0 // pred_fallthru
    _
  // Predicated region
  $region6: #{tpu_custom_call.1} parent=0 // pred_check
    _
  $region7: #{tpu_custom_call.1} parent=0 // pred_check_branch
    %13 = sbr.rel (0) target = $region9
  $region8: #{tpu_custom_call.1} parent=0 // pred_region
    _
  $region9: #{tpu_custom_call.1} parent=0 // pred_fallthru
    _
  // Predicated region
  $region10: #{tpu_custom_call.1} parent=0 // pred_check
    _
  $region11: #{tpu_custom_call.1} parent=0 // pred_check_branch
    %15 = sbr.rel (0) target = $region13
  $region12: #{tpu_custom_call.1} parent=0 // pred_region
    _
  $region13: #{tpu_custom_call.1} parent=0 // pred_fallthru
    _
  // Predicated region
  $region14: #{tpu_custom_call.1} parent=0 // pred_check
    _
  $region15: #{tpu_custom_call.1} parent=0 // pred_check_branch
    %17 = sbr.rel (0) target = $region17
  $region16: #{tpu_custom_call.1} parent=0 // pred_region
    _
  $region17: #{tpu_custom_call.1} parent=0 // pred_fallthru
    _
  // Predicated region
  $region18: #{tpu_custom_call.1} parent=0 // pred_check
    _
  $region19: #{tpu_custom_call.1} parent=0 // pred_check_branch
    %19 = sbr.rel (0) target = $region21
  $region20: #{tpu_custom_call.1} parent=0 // pred_region
    _
  $region21: #{tpu_custom_call.1} parent=0 // pred_fallthru
    _
  %v20 = vld [vmem:[%s0] sm:$0xff]
  %v21 = vld [vmem:[%s1] sm:$0xff]
  %v22 = vld [vmem:[%s1 + $0x8] sm:$0xff]
  %v23 = vld [vmem:[%s1 + $0x10] sm:$0xff]
  %v24 = vld [vmem:[%s1 + $0x18] sm:$0xff]
  %v25 = vld [vmem:[%s4] sm:$0xff]
  %v26 = vld [vmem:[%s4 + $0x8] sm:$0xff]
  %v27 = vld [vmem:[%s4 + $0x10] sm:$0xff]
  %v28 = vld [vmem:[%s4 + $0x18] sm:$0xff]
  %30 = vset.pattern.permute.xlu0 0
  %31 = vperm.xlu0 %30, %v25
  %v32 = vpop.permute.xlu0 %31
  %35 = vset.pattern.permute.xlu0 0
  %36 = vperm.xlu0 %35, %v26
  %v37 = vpop.permute.xlu0 %36
  %40 = vset.pattern.permute.xlu0 0
  %41 = vperm.xlu0 %40, %v27
  %v42 = vpop.permute.xlu0 %41
  %45 = vset.pattern.permute.xlu0 0
  %46 = vperm.xlu0 %45, %v28
  %v47 = vpop.permute.xlu0 %46
  %vm49 = vcmask 195584
  %v51 = vsel %vm49, %v21, 0
  %v54 = vsel %vm49, %v22, 0
  %v57 = vsel %vm49, %v23, 0
  %v60 = vsel %vm49, %v24, 0
  %v63 = vsel %vm49, %v20, 0
  %65 = vmatpush.xpose.msra.mxu0 0.0
  %66 = vmatpush.xpose.msra.mxu0 0.0
  %67 = vmatpush.xpose.msra.mxu0 0.0
  %68 = vmatpush.xpose.msra.mxu0 0.0
  %69 = vmatpush.xpose.msra.mxu0 0.0
  %70 = vmatpush.xpose.msra.mxu0 0.0
  %71 = vmatpush.xpose.msra.mxu0 0.0
  %72 = vmatpush.xpose.msra.mxu0 0.0
  %73 = vmatpush.xpose.msra.mxu0 0.0
  %74 = vmatpush.xpose.msra.mxu0 0.0
  %75 = vmatpush.xpose.msra.mxu0 0.0
  %76 = vmatpush.xpose.msra.mxu0 0.0
  %77 = vmatpush.xpose.msra.mxu0 0.0
  %78 = vmatpush.xpose.msra.mxu0 0.0
  %79 = vmatpush.xpose.msra.mxu0 0.0
  %80 = vmatpush.xpose.msra.mxu0 %v63
  %81 = vmatmul.f32.gmra.mxu0 %v51
  %v82 = vpop.f32.mrf.mxu0
  %v83 = vadd.f32 %v32, %v82
  %84 = vmatmul.f32.gmra.mxu0 %v54
  %v85 = vpop.f32.mrf.mxu0
  %v86 = vadd.f32 %v37, %v85
  %87 = vmatmul.f32.gmra.mxu0 %v57
  %v88 = vpop.f32.mrf.mxu0
  %v89 = vadd.f32 %v42, %v88
  %90 = vmatmul.f32.gmra.mxu0 %v60
  %v91 = vpop.f32.mrf.mxu0
  %v92 = vadd.f32 %v47, %v91
  %93 = vdwg.mxu0
  %v94 = vmax.f32 %v83, 0.0
  %v95 = vmax.f32 %v86, 0.0
  %v96 = vmax.f32 %v89, 0.0
  %v97 = vmax.f32 %v92, 0.0
  %v98 = vld [vmem:[%s2] sm:$0xff]
  %v99 = vld [vmem:[%s2 + $0x8] sm:$0xff]
  %v100 = vld [vmem:[%s2 + $0x10] sm:$0xff]
  %v101 = vld [vmem:[%s2 + $0x18] sm:$0xff]
  %v102 = vld [vmem:[%s4 + $0x20] sm:$0xff]
  %v103 = vld [vmem:[%s4 + $0x28] sm:$0xff]
  %v104 = vld [vmem:[%s4 + $0x30] sm:$0xff]
  %v105 = vld [vmem:[%s4 + $0x38] sm:$0xff]
  %107 = vset.pattern.permute.xlu0 0
  %108 = vperm.xlu0 %107, %v102
  %v109 = vpop.permute.xlu0 %108
  %112 = vset.pattern.permute.xlu0 0
  %113 = vperm.xlu0 %112, %v103
  %v114 = vpop.permute.xlu0 %113
  %117 = vset.pattern.permute.xlu0 0
  %118 = vperm.xlu0 %117, %v104
  %v119 = vpop.permute.xlu0 %118
  %122 = vset.pattern.permute.xlu0 0
  %123 = vperm.xlu0 %122, %v105
  %v124 = vpop.permute.xlu0 %123
  %vm126 = vcmask 261120
  %v128 = vsel %vm126, %v98, 0
  %v131 = vsel %vm126, %v99, 0
  %v134 = vsel %vm126, %v100, 0
  %v137 = vsel %vm126, %v101, 0
  %139 = vmatpush.msra.mxu0 0.0
  %140 = vmatpush.msra.mxu0 0.0
  %141 = vmatpush.msra.mxu0 0.0
  %142 = vmatpush.msra.mxu0 0.0
  %143 = vmatpush.msra.mxu0 0.0
  %144 = vmatpush.msra.mxu0 0.0
  %145 = vmatpush.msra.mxu0 0.0
  %146 = vmatpush.msra.mxu0 0.0
  %147 = vmatpush.msra.mxu0 0.0
  %148 = vmatpush.msra.mxu0 0.0
  %149 = vmatpush.msra.mxu0 0.0
  %150 = vmatpush.msra.mxu0 0.0
  %151 = vmatpush.msra.mxu0 %v97
  %152 = vmatpush.msra.mxu0 %v96
  %153 = vmatpush.msra.mxu0 %v95
  %154 = vmatpush.msra.mxu0 %v94
  %155 = vmatmul.f32.gmra.mxu0 %v128
  %v156 = vpop.f32.mrf.mxu0
  %v157 = vadd.f32 %v109, %v156
  %158 = vmatmul.f32.gmra.mxu0 %v131
  %v159 = vpop.f32.mrf.mxu0
  %v160 = vadd.f32 %v114, %v159
  %161 = vmatmul.f32.gmra.mxu0 %v134
  %v162 = vpop.f32.mrf.mxu0
  %v163 = vadd.f32 %v119, %v162
  %164 = vmatmul.f32.gmra.mxu0 %v137
  %v165 = vpop.f32.mrf.mxu0
  %v166 = vadd.f32 %v124, %v165
  %167 = vdwg.mxu0
  %v168 = vmax.f32 %v157, 0.0
  %v169 = vmax.f32 %v160, 0.0
  %v170 = vmax.f32 %v163, 0.0
  %v171 = vmax.f32 %v166, 0.0
  %v172 = vld [vmem:[%s3] sm:$0xff]
  %v173 = vld [vmem:[%s3 + $0x8] sm:$0xff]
  %v174 = vld [vmem:[%s4 + $0x40] sm:$0xff]
  %v175 = vld [vmem:[%s4 + $0x48] sm:$0xff]
  %177 = vset.pattern.permute.xlu0 0
  %178 = vperm.xlu0 %177, %v174
  %v179 = vpop.permute.xlu0 %178
  %182 = vset.pattern.permute.xlu0 0
  %183 = vperm.xlu0 %182, %v175
  %v184 = vpop.permute.xlu0 %183
  %v187 = vsel %vm126, %v172, 0
  %v190 = vsel %vm126, %v173, 0
  %192 = vmatpush.msra.mxu0 0.0
  %193 = vmatpush.msra.mxu0 0.0
  %194 = vmatpush.msra.mxu0 0.0
  %195 = vmatpush.msra.mxu0 0.0
  %196 = vmatpush.msra.mxu0 0.0
  %197 = vmatpush.msra.mxu0 0.0
  %198 = vmatpush.msra.mxu0 0.0
  %199 = vmatpush.msra.mxu0 0.0
  %200 = vmatpush.msra.mxu0 0.0
  %201 = vmatpush.msra.mxu0 0.0
  %202 = vmatpush.msra.mxu0 0.0
  %203 = vmatpush.msra.mxu0 0.0
  %204 = vmatpush.msra.mxu0 %v171
  %205 = vmatpush.msra.mxu0 %v170
  %206 = vmatpush.msra.mxu0 %v169
  %207 = vmatpush.msra.mxu0 %v168
  %208 = vmatmul.f32.gmra.mxu0 %v187
  %v209 = vpop.f32.mrf.mxu0
  %v210 = vadd.f32 %v179, %v209
  %211 = vmatmul.f32.gmra.mxu0 %v190
  %v212 = vpop.f32.mrf.mxu0
  %v213 = vadd.f32 %v184, %v212
  %214 = vdwg.mxu0
  %vm215 = vcmask 64512
  %v216 = vsel %vm215, %v210, 0.0
  %v217 = vsel %vm215, %v213, 0.0
  %v218 = vadd.f32 %v216, %v217
  %v219 = vrot.slane %v218, 4
  %v220 = vadd.f32 %v218, %v219
  %v221 = vrot.slane %v220, 2
  %v222 = vadd.f32 %v220, %v221
  %v223 = vrot.slane %v222, 1
  %v224 = vadd.f32 %v222, %v223
  %v225 = vrcp.pop 16.0
  %v226 = vmul.f32 16.0, %v225
  %v227 = vsub.f32 1.0, %v226
  %v228 = vmul.f32 %v225, %v227
  %v229 = vadd.f32 %v225, %v228
  %vm230 = vweird.f32 %v225
  %v231 = vsel %vm230, %v225, %v229
  %v232 = vmul.f32 %v224, %v231
  %v233 = vsub.f32 %v210, %v232
  %v234 = vsub.f32 %v213, %v232
  %v235 = vmul.f32 %v233, %v233
  %v236 = vmul.f32 %v234, %v234
  %v237 = vsel %vm215, %v235, 0.0
  %v238 = vsel %vm215, %v236, 0.0
  %v239 = vadd.f32 %v237, %v238
  %v240 = vrot.slane %v239, 4
  %v241 = vadd.f32 %v239, %v240
  %v242 = vrot.slane %v241, 2
  %v243 = vadd.f32 %v241, %v242
  %v244 = vrot.slane %v243, 1
  %v245 = vadd.f32 %v243, %v244
  %v246 = vmul.f32 %v245, %v231
  %v247 = vadd.f32 %v246, 1e-05
  %v248 = vrsqrt.pop %v247
  %v249 = vmul.f32 %v248, %v247
  %v250 = vmul.f32 %v249, %v248
  %v251 = vmul.f32 0.5, %v250
  %v252 = vsub.f32 1.5, %v251
  %v253 = vmul.f32 %v248, %v252
  %vm254 = vweird.f32 %v247
  %vm255 = vweird.f32 %v248
  %vm256 = vmor %vm254, %vm255
  %v257 = vsel %vm256, %v248, %v253
  %v258 = vmul.f32 %v233, %v257
  %v259 = vmul.f32 %v234, %v257
  %v260 = vld [vmem:[%s4 + $0x50] sm:$0xff]
  %v261 = vld [vmem:[%s4 + $0x58] sm:$0xff]
  %263 = vset.pattern.permute.xlu0 0
  %264 = vperm.xlu0 %263, %v260
  %v265 = vpop.permute.xlu0 %264
  %268 = vset.pattern.permute.xlu0 0
  %269 = vperm.xlu0 %268, %v261
  %v270 = vpop.permute.xlu0 %269
  %v272 = vmul.f32 %v258, %v265
  %v273 = vmul.f32 %v259, %v270
  %v274 = vld [vmem:[%s4 + $0x60] sm:$0xff]
  %v275 = vld [vmem:[%s4 + $0x68] sm:$0xff]
  %277 = vset.pattern.permute.xlu0 0
  %278 = vperm.xlu0 %277, %v274
  %v279 = vpop.permute.xlu0 %278
  %282 = vset.pattern.permute.xlu0 0
  %283 = vperm.xlu0 %282, %v275
  %v284 = vpop.permute.xlu0 %283
  %v286 = vadd.f32 %v272, %v279
  %v287 = vadd.f32 %v273, %v284
  %v288 = vtanh.pop %v286
  %v289 = vtanh.pop %v287
  %290 = vst.msk [vmem:[%s5] sm:$0xff] %vm215, %v288
  %291 = vst.msk [vmem:[%s5 + $0x8] sm:$0xff] %vm215, %v289
  // Predicated region
  $region22: #{tpu_custom_call.1} parent=0 // pred_check
    _
  $region23: #{tpu_custom_call.1} parent=0 // pred_check_branch
    %293 = sbr.rel (0) target = $region25
  $region24: #{tpu_custom_call.1} parent=0 // pred_region
    _
  $region25: #{tpu_custom_call.1} parent=0 // pred_fallthru
    _
  // Predicated region
  $region26: #{tpu_custom_call.1} parent=0 // pred_check
    _
  $region27: #{tpu_custom_call.1} parent=0 // pred_check_branch
    %295 = sbr.rel (0) target = $region29
  $region28: #{tpu_custom_call.1} parent=0 // pred_region
    _
  $region29: #{tpu_custom_call.1} parent=0 // pred_fallthru
    _

</llo_original>
